<compile_context>
chip_gen: v7x
topology: tpu7x:2x2x1
jax: 0.10.0
libtpu: 0.0.40
codegen_flags: <defaults>
</compile_context>

<pallas_src>
import functools

import jax
import jax.numpy as jnp
from jax import lax
from jax.experimental import pallas as pl
from jax.experimental.pallas import tpu as pltpu


# ----------------------------------------------------------------------------
# Pallas kernel: one bidirectional GRU timestep per grid iteration.
# Gate order follows PyTorch (r, z, n); x-projections (incl. folded biases) are
# precomputed, so each step only does h @ W_hh (fused 3H-wide) per direction.
# ----------------------------------------------------------------------------
def _bigru_step_kernel(xpf_ref, xpb_ref,
                       whh_f_ref, whh_b_ref,
                       bhn_f_ref, bhn_b_ref,
                       out_f_ref, out_b_ref,
                       hf_sc, hb_sc):
    H = whh_f_ref.shape[0]

    @pl.when(pl.program_id(0) == 0)
    def _():
        hf_sc[...] = jnp.zeros_like(hf_sc)
        hb_sc[...] = jnp.zeros_like(hb_sc)

    h_f = hf_sc[...]                      # (N, H) f32 carried across grid steps
    h_b = hb_sc[...]

    # One fused recurrent matmul per direction: (N, H) @ (H, 3H) -> (N, 3H)
    gh_f = jnp.dot(h_f, whh_f_ref[...], preferred_element_type=jnp.float32)
    gh_b = jnp.dot(h_b, whh_b_ref[...], preferred_element_type=jnp.float32)

    xp_f = xpf_ref[0]                     # (N, 3H): x·W_ih + b_ih + [b_hr|b_hz|0]
    xp_b = xpb_ref[0]

    # r|z stacked -> single sigmoid stream per direction.
    rz_f = jax.nn.sigmoid(xp_f[:, :2 * H] + gh_f[:, :2 * H])
    rz_b = jax.nn.sigmoid(xp_b[:, :2 * H] + gh_b[:, :2 * H])

    n_f = jnp.tanh(xp_f[:, 2 * H:] + rz_f[:, :H] * (gh_f[:, 2 * H:] + bhn_f_ref[...]))
    n_b = jnp.tanh(xp_b[:, 2 * H:] + rz_b[:, :H] * (gh_b[:, 2 * H:] + bhn_b_ref[...]))

    z_f = rz_f[:, H:]
    z_b = rz_b[:, H:]

    # (1 - z) * n + z * h  ==  n + z * (h - n)
    h_f_new = n_f + z_f * (h_f - n_f)
    h_b_new = n_b + z_b * (h_b - n_b)

    hf_sc[...] = h_f_new
    hb_sc[...] = h_b_new

    out_f_ref[0] = h_f_new.astype(out_f_ref.dtype)
    out_b_ref[0] = h_b_new.astype(out_b_ref.dtype)


def _run_bigru_rec(xp_f, xp_b, kp, hidden_size):
    """xp_f / xp_b: (T, N, 3H) precomputed input projections (time-major).
    Returns (out_f, out_b), each (T, N, H)."""
    T, N, _ = xp_f.shape
    H = hidden_size

    def fwd_t(t):
        return (t, 0, 0)

    def bwd_t(t):
        return (T - 1 - t, 0, 0)

    out_f, out_b = pl.pallas_call(
        _bigru_step_kernel,
        out_shape=(jax.ShapeDtypeStruct((T, N, H), jnp.float32),
                   jax.ShapeDtypeStruct((T, N, H), jnp.float32)),
        grid_spec=pltpu.PrefetchScalarGridSpec(
            num_scalar_prefetch=0,
            grid=(T,),
            in_specs=[
                pl.BlockSpec((1, N, 3 * H), fwd_t),          # fwd x-projection slab
                pl.BlockSpec((1, N, 3 * H), bwd_t),          # bwd x-projection slab
                pl.BlockSpec((H, 3 * H), lambda t: (0, 0)),  # W_hh fwd (resident)
                pl.BlockSpec((H, 3 * H), lambda t: (0, 0)),  # W_hh bwd (resident)
                pl.BlockSpec((1, H), lambda t: (0, 0)),      # b_hn fwd
                pl.BlockSpec((1, H), lambda t: (0, 0)),      # b_hn bwd
            ],
            out_specs=(pl.BlockSpec((1, N, H), fwd_t),
                       pl.BlockSpec((1, N, H), bwd_t)),
            scratch_shapes=[pltpu.VMEM((N, H), jnp.float32),
                            pltpu.VMEM((N, H), jnp.float32)],
        ),
        compiler_params=pltpu.CompilerParams(
            dimension_semantics=("arbitrary",)),   # time axis is serial
    )(xp_f, xp_b, kp["whh_f"], kp["whh_b"], kp["bhn_f"], kp["bhn_b"])
    return out_f, out_b


# ----------------------------------------------------------------------------
# Wrapper reproducing GRUEncoder.forward semantics
# ----------------------------------------------------------------------------
def gru_encoder_forward(embed, kernel_params, embedding_size, hidden_size):
    if embed.ndim == 3:
        embed = embed[:, None]                      # unsqueeze(1)
    assert embed.ndim == 4
    B, S, T, E = embed.shape
    assert E == embedding_size
    H = hidden_size
    N = B * S

    x = embed.reshape(N, T, E).astype(jnp.float32)
    x_tme = jnp.transpose(x, (1, 0, 2))             # (T, N, E) time-major

    # Bulk input projection (both directions fused): (T*N, E) @ (E, 6H).
    xp = jnp.dot(x_tme.reshape(T * N, E), kernel_params["wih_all"],
                 preferred_element_type=jnp.float32) + kernel_params["bih_all"]
    xp = xp.reshape(T, N, 6 * H)
    xp_f = xp[..., :3 * H]
    xp_b = xp[..., 3 * H:]

    out_f, out_b = _run_bigru_rec(xp_f, xp_b, kernel_params, H)   # (T, N, H) each
    U = jnp.concatenate([out_f, out_b], axis=-1)    # (T, N, 2H)
    U = jnp.transpose(U, (1, 0, 2))                 # (N, T, 2H)
    U = U.reshape(B, S, T, 2 * H)
    if S == 1:
        U = U[:, 0]                                 # squeeze(1)
    return U                                        # dropout == identity (eval)


# ----------------------------------------------------------------------------
# Parameters: raw PyTorch-style (kaiming_normal_ for matrices, normal_ for
# biases, exactly like the module's __init__), then converted to kernel layout.
# ----------------------------------------------------------------------------
def init_raw_params(key, embedding_size, hidden_size):
    E, H = embedding_size, hidden_size
    keys = jax.random.split(key, 8)

    def kaiming(k, shape):
        fan_in = shape[1]
        return jax.random.normal(k, shape, jnp.float32) * jnp.sqrt(2.0 / fan_in)

    return dict(
        w_ih_f=kaiming(keys[0], (3 * H, E)),
        w_hh_f=kaiming(keys[1], (3 * H, H)),
        b_ih_f=jax.random.normal(keys[2], (3 * H,), jnp.float32),
        b_hh_f=jax.random.normal(keys[3], (3 * H,), jnp.float32),
        w_ih_b=kaiming(keys[4], (3 * H, E)),
        w_hh_b=kaiming(keys[5], (3 * H, H)),
        b_ih_b=jax.random.normal(keys[6], (3 * H,), jnp.float32),
        b_hh_b=jax.random.normal(keys[7], (3 * H,), jnp.float32),
    )


def prepare_kernel_params(raw, hidden_size):
    H = hidden_size

    def fold_bias(b_ih, b_hh):
        # Fold b_hr, b_hz into the precomputed projection bias; keep b_hn out.
        return b_ih + jnp.concatenate([b_hh[:2 * H], jnp.zeros((H,), b_hh.dtype)])

    wih_all = jnp.concatenate([raw["w_ih_f"].T, raw["w_ih_b"].T], axis=1)  # (E, 6H)
    bih_all = jnp.concatenate([fold_bias(raw["b_ih_f"], raw["b_hh_f"]),
                               fold_bias(raw["b_ih_b"], raw["b_hh_b"])])   # (6H,)
    return dict(
        wih_all=wih_all,
        bih_all=bih_all,
        whh_f=raw["w_hh_f"].T,                       # (H, 3H), columns r|z|n
        whh_b=raw["w_hh_b"].T,
        bhn_f=raw["b_hh_f"][2 * H:].reshape(1, H),   # n-gate hidden bias
        bhn_b=raw["b_hh_b"][2 * H:].reshape(1, H),
    )


# ----------------------------------------------------------------------------
# Pure-JAX reference (lax.scan) built straight from the raw PyTorch-style
# parameters — independent check of both the layout conversion and the kernel.
# ----------------------------------------------------------------------------
def _ref_bigru(x_tme, raw, H):
    def make_step(w_ih, w_hh, b_ih, b_hh):
        W_ir, W_iz, W_in = w_ih[:H], w_ih[H:2 * H], w_ih[2 * H:]
        W_hr, W_hz, W_hn = w_hh[:H], w_hh[H:2 * H], w_hh[2 * H:]
        b_ir, b_iz, b_in = b_ih[:H], b_ih[H:2 * H], b_ih[2 * H:]
        b_hr, b_hz, b_hn = b_hh[:H], b_hh[H:2 * H], b_hh[2 * H:]

        def step(h, x_t):
            r = jax.nn.sigmoid(x_t @ W_ir.T + b_ir + h @ W_hr.T + b_hr)
            z = jax.nn.sigmoid(x_t @ W_iz.T + b_iz + h @ W_hz.T + b_hz)
            n = jnp.tanh(x_t @ W_in.T + b_in + r * (h @ W_hn.T + b_hn))
            h_new = (1.0 - z) * n + z * h
            return h_new, h_new
        return step

    T, N, _ = x_tme.shape
    h0 = jnp.zeros((N, H), jnp.float32)
    _, yf = lax.scan(make_step(raw["w_ih_f"], raw["w_hh_f"],
                               raw["b_ih_f"], raw["b_hh_f"]), h0, x_tme)
    _, yb = lax.scan(make_step(raw["w_ih_b"], raw["w_hh_b"],
                               raw["b_ih_b"], raw["b_hh_b"]), h0, x_tme[::-1])
    return yf, yb[::-1]


if __name__ == "__main__":
    embedding_size = 16
    hidden_size = 32
    batch = 2
    seq_len = 8

    key = jax.random.PRNGKey(0)
    k_param, k_x = jax.random.split(key)
    raw_params = init_raw_params(k_param, embedding_size, hidden_size)
    kernel_params = prepare_kernel_params(raw_params, hidden_size)

    # 3-D input (batch, seq, embedding) -> module treats sentence_num == 1
    embed = jax.random.normal(k_x, (batch, seq_len, embedding_size), jnp.float32)

    fwd = functools.partial(gru_encoder_forward, kernel_params=kernel_params,
                            embedding_size=embedding_size, hidden_size=hidden_size)
    U = jax.jit(fwd)(embed)
    U = jax.block_until_ready(U)
    assert U.shape == (batch, seq_len, 2 * hidden_size), U.shape

    # Correctness check against a pure-JAX scan reference.
    x_tme = jnp.transpose(embed, (1, 0, 2))
    yf, yb = _ref_bigru(x_tme, raw_params, hidden_size)
    U_ref = jnp.transpose(jnp.concatenate([yf, yb], axis=-1), (1, 0, 2))
    assert jnp.allclose(U, U_ref, atol=2e-5, rtol=2e-5), \
        float(jnp.max(jnp.abs(U - U_ref)))

    print("KERNEL_OK")
</pallas_src>

<mosaic_0001>
module attributes {stable_mosaic.version = 11 : i64} {
  func.func @_bigru_step_kernel(%arg0: i32, %arg1: memref<1x2x96xf32, #tpu.memory_space<vmem>>, %arg2: memref<1x2x96xf32, #tpu.memory_space<vmem>>, %arg3: memref<32x96xf32, #tpu.memory_space<vmem>>, %arg4: memref<32x96xf32, #tpu.memory_space<vmem>>, %arg5: memref<1x32xf32, #tpu.memory_space<vmem>>, %arg6: memref<1x32xf32, #tpu.memory_space<vmem>>, %arg7: memref<1x2x32xf32, #tpu.memory_space<vmem>>, %arg8: memref<1x2x32xf32, #tpu.memory_space<vmem>>, %arg9: memref<2x32xf32, #tpu.memory_space<vmem>>, %arg10: memref<2x32xf32, #tpu.memory_space<vmem>>) attributes {dimension_semantics = [#tpu.dimension_semantics<arbitrary>], iteration_bounds = array<i64: 8>, scalar_prefetch = 0 : i64, scratch_operands = 2 : i64, tpu.core_type = #tpu.core_type<tc>, window_params = [{transform_indices = @transform_0, window_bounds = array<i64: 1, 2, 96>}, {transform_indices = @transform_1, window_bounds = array<i64: 1, 2, 96>}, {pipeline_mode = #tpu.pipeline_mode<synchronous>, transform_indices = @transform_2, window_bounds = array<i64: 32, 96>}, {pipeline_mode = #tpu.pipeline_mode<synchronous>, transform_indices = @transform_3, window_bounds = array<i64: 32, 96>}, {pipeline_mode = #tpu.pipeline_mode<synchronous>, transform_indices = @transform_4, window_bounds = array<i64: 1, 32>}, {pipeline_mode = #tpu.pipeline_mode<synchronous>, transform_indices = @transform_5, window_bounds = array<i64: 1, 32>}, {transform_indices = @transform_6, window_bounds = array<i64: 1, 2, 32>}, {transform_indices = @transform_7, window_bounds = array<i64: 1, 2, 32>}]} {
    %c0_i32 = arith.constant 0 : i32
    %0 = arith.cmpi eq, %arg0, %c0_i32 : i32
    %1 = arith.extui %0 : i1 to i32
    %c0_i32_0 = arith.constant 0 : i32
    %2 = arith.cmpi ne, %1, %c0_i32_0 : i32
    scf.if %2 {
      %cst_31 = arith.constant 0.000000e+00 : f32
      %63 = vector.broadcast %cst_31 : f32 to vector<2x32xf32>
      %c0_32 = arith.constant 0 : index
      %c0_33 = arith.constant 0 : index
      %64 = vector.load %arg9[%c0_32, %c0_33] : memref<2x32xf32, #tpu.memory_space<vmem>>, vector<2x32xf32>
      tpu.vector_store %arg9[%c0_32, %c0_33], %63 {strides = array<i32>} : memref<2x32xf32, #tpu.memory_space<vmem>>, vector<2x32xf32>,
      %cst_34 = arith.constant 0.000000e+00 : f32
      %65 = vector.broadcast %cst_34 : f32 to vector<2x32xf32>
      %c0_35 = arith.constant 0 : index
      %c0_36 = arith.constant 0 : index
      %66 = vector.load %arg10[%c0_35, %c0_36] : memref<2x32xf32, #tpu.memory_space<vmem>>, vector<2x32xf32>
      tpu.vector_store %arg10[%c0_35, %c0_36], %65 {strides = array<i32>} : memref<2x32xf32, #tpu.memory_space<vmem>>, vector<2x32xf32>,
    } else {
    }
    %c0 = arith.constant 0 : index
    %c0_1 = arith.constant 0 : index
    %3 = vector.load %arg9[%c0, %c0_1] : memref<2x32xf32, #tpu.memory_space<vmem>>, vector<2x32xf32>
    %c0_2 = arith.constant 0 : index
    %c0_3 = arith.constant 0 : index
    %4 = vector.load %arg10[%c0_2, %c0_3] : memref<2x32xf32, #tpu.memory_space<vmem>>, vector<2x32xf32>
    %c0_4 = arith.constant 0 : index
    %c0_5 = arith.constant 0 : index
    %5 = vector.load %arg3[%c0_4, %c0_5] : memref<32x96xf32, #tpu.memory_space<vmem>>, vector<32x96xf32>
    %cst = arith.constant dense<0.000000e+00> : vector<2x96xf32>
    %6 = tpu.matmul %3, %5, %cst {dimension_numbers = #tpu.dot_dimension_numbers<[1], [0], [0], [1], [0, 0, 1, 1], [], []>} : vector<2x32xf32>, vector<32x96xf32>, vector<2x96xf32> -> vector<2x96xf32>
    %c0_6 = arith.constant 0 : index
    %c0_7 = arith.constant 0 : index
    %7 = vector.load %arg4[%c0_6, %c0_7] : memref<32x96xf32, #tpu.memory_space<vmem>>, vector<32x96xf32>
    %cst_8 = arith.constant dense<0.000000e+00> : vector<2x96xf32>
    %8 = tpu.matmul %4, %7, %cst_8 {dimension_numbers = #tpu.dot_dimension_numbers<[1], [0], [0], [1], [0, 0, 1, 1], [], []>} : vector<2x32xf32>, vector<32x96xf32>, vector<2x96xf32> -> vector<2x96xf32>
    %c0_9 = arith.constant 0 : index
    %c0_10 = arith.constant 0 : index
    %c0_11 = arith.constant 0 : index
    %9 = vector.load %arg1[%c0_9, %c0_10, %c0_11] : memref<1x2x96xf32, #tpu.memory_space<vmem>>, vector<1x2x96xf32>
    %10 = vector.shape_cast %9 : vector<1x2x96xf32> to vector<2x96xf32>
    %c0_12 = arith.constant 0 : index
    %c0_13 = arith.constant 0 : index
    %c0_14 = arith.constant 0 : index
    %11 = vector.load %arg2[%c0_12, %c0_13, %c0_14] : memref<1x2x96xf32, #tpu.memory_space<vmem>>, vector<1x2x96xf32>
    %12 = vector.shape_cast %11 : vector<1x2x96xf32> to vector<2x96xf32>
    %13 = vector.extract_strided_slice %10 {offsets = [0, 0], sizes = [2, 64], strides = [1, 1]} : vector<2x96xf32> to vector<2x64xf32>
    %14 = vector.extract_strided_slice %6 {offsets = [0, 0], sizes = [2, 64], strides = [1, 1]} : vector<2x96xf32> to vector<2x64xf32>
    %15 = arith.addf %13, %14 : vector<2x64xf32>
    %16 = arith.negf %15 : vector<2x64xf32>
    %17 = math.exp %16 : vector<2x64xf32>
    %cst_15 = arith.constant 1.000000e+00 : f32
    %18 = vector.broadcast %cst_15 : f32 to vector<2x64xf32>
    %19 = arith.addf %18, %17 : vector<2x64xf32>
    %20 = arith.divf %18, %19 : vector<2x64xf32>
    %21 = vector.extract_strided_slice %12 {offsets = [0, 0], sizes = [2, 64], strides = [1, 1]} : vector<2x96xf32> to vector<2x64xf32>
    %22 = vector.extract_strided_slice %8 {offsets = [0, 0], sizes = [2, 64], strides = [1, 1]} : vector<2x96xf32> to vector<2x64xf32>
    %23 = arith.addf %21, %22 : vector<2x64xf32>
    %24 = arith.negf %23 : vector<2x64xf32>
    %25 = math.exp %24 : vector<2x64xf32>
    %cst_16 = arith.constant 1.000000e+00 : f32
    %26 = vector.broadcast %cst_16 : f32 to vector<2x64xf32>
    %27 = arith.addf %26, %25 : vector<2x64xf32>
    %28 = arith.divf %26, %27 : vector<2x64xf32>
    %29 = vector.extract_strided_slice %10 {offsets = [0, 64], sizes = [2, 32], strides = [1, 1]} : vector<2x96xf32> to vector<2x32xf32>
    %30 = vector.extract_strided_slice %20 {offsets = [0, 0], sizes = [2, 32], strides = [1, 1]} : vector<2x64xf32> to vector<2x32xf32>
    %31 = vector.extract_strided_slice %6 {offsets = [0, 64], sizes = [2, 32], strides = [1, 1]} : vector<2x96xf32> to vector<2x32xf32>
    %c0_17 = arith.constant 0 : index
    %c0_18 = arith.constant 0 : index
    %32 = vector.load %arg5[%c0_17, %c0_18] : memref<1x32xf32, #tpu.memory_space<vmem>>, vector<1x32xf32>
    %33 = vector.broadcast %32 : vector<1x32xf32> to vector<2x32xf32>
    %34 = arith.addf %31, %33 : vector<2x32xf32>
    %35 = arith.mulf %30, %34 : vector<2x32xf32>
    %36 = arith.addf %29, %35 : vector<2x32xf32>
    %37 = math.tanh %36 : vector<2x32xf32>
    %38 = vector.extract_strided_slice %12 {offsets = [0, 64], sizes = [2, 32], strides = [1, 1]} : vector<2x96xf32> to vector<2x32xf32>
    %39 = vector.extract_strided_slice %28 {offsets = [0, 0], sizes = [2, 32], strides = [1, 1]} : vector<2x64xf32> to vector<2x32xf32>
    %40 = vector.extract_strided_slice %8 {offsets = [0, 64], sizes = [2, 32], strides = [1, 1]} : vector<2x96xf32> to vector<2x32xf32>
    %c0_19 = arith.constant 0 : index
    %c0_20 = arith.constant 0 : index
    %41 = vector.load %arg6[%c0_19, %c0_20] : memref<1x32xf32, #tpu.memory_space<vmem>>, vector<1x32xf32>
    %42 = vector.broadcast %41 : vector<1x32xf32> to vector<2x32xf32>
    %43 = arith.addf %40, %42 : vector<2x32xf32>
    %44 = arith.mulf %39, %43 : vector<2x32xf32>
    %45 = arith.addf %38, %44 : vector<2x32xf32>
    %46 = math.tanh %45 : vector<2x32xf32>
    %47 = vector.extract_strided_slice %20 {offsets = [0, 32], sizes = [2, 32], strides = [1, 1]} : vector<2x64xf32> to vector<2x32xf32>
    %48 = vector.extract_strided_slice %28 {offsets = [0, 32], sizes = [2, 32], strides = [1, 1]} : vector<2x64xf32> to vector<2x32xf32>
    %49 = arith.subf %3, %37 : vector<2x32xf32>
    %50 = arith.mulf %47, %49 : vector<2x32xf32>
    %51 = arith.addf %37, %50 : vector<2x32xf32>
    %52 = arith.subf %4, %46 : vector<2x32xf32>
    %53 = arith.mulf %48, %52 : vector<2x32xf32>
    %54 = arith.addf %46, %53 : vector<2x32xf32>
    %c0_21 = arith.constant 0 : index
    %c0_22 = arith.constant 0 : index
    %55 = vector.load %arg9[%c0_21, %c0_22] : memref<2x32xf32, #tpu.memory_space<vmem>>, vector<2x32xf32>
    tpu.vector_store %arg9[%c0_21, %c0_22], %51 {strides = array<i32>} : memref<2x32xf32, #tpu.memory_space<vmem>>, vector<2x32xf32>,
    %c0_23 = arith.constant 0 : index
    %c0_24 = arith.constant 0 : index
    %56 = vector.load %arg10[%c0_23, %c0_24] : memref<2x32xf32, #tpu.memory_space<vmem>>, vector<2x32xf32>
    tpu.vector_store %arg10[%c0_23, %c0_24], %54 {strides = array<i32>} : memref<2x32xf32, #tpu.memory_space<vmem>>, vector<2x32xf32>,
    %c0_25 = arith.constant 0 : index
    %c0_26 = arith.constant 0 : index
    %c0_27 = arith.constant 0 : index
    %57 = vector.load %arg7[%c0_25, %c0_26, %c0_27] : memref<1x2x32xf32, #tpu.memory_space<vmem>>, vector<1x2x32xf32>
    %58 = vector.shape_cast %57 : vector<1x2x32xf32> to vector<2x32xf32>
    %59 = vector.shape_cast %51 : vector<2x32xf32> to vector<1x2x32xf32>
    tpu.vector_store %arg7[%c0_25, %c0_26, %c0_27], %59 {strides = array<i32>} : memref<1x2x32xf32, #tpu.memory_space<vmem>>, vector<1x2x32xf32>,
    %c0_28 = arith.constant 0 : index
    %c0_29 = arith.constant 0 : index
    %c0_30 = arith.constant 0 : index
    %60 = vector.load %arg8[%c0_28, %c0_29, %c0_30] : memref<1x2x32xf32, #tpu.memory_space<vmem>>, vector<1x2x32xf32>
    %61 = vector.shape_cast %60 : vector<1x2x32xf32> to vector<2x32xf32>
    %62 = vector.shape_cast %54 : vector<2x32xf32> to vector<1x2x32xf32>
    tpu.vector_store %arg8[%c0_28, %c0_29, %c0_30], %62 {strides = array<i32>} : memref<1x2x32xf32, #tpu.memory_space<vmem>>, vector<1x2x32xf32>,
    return
  }
  func.func @transform_0(%arg0: i32) -> (i32, i32, i32) {
    %c0_i32 = arith.constant 0 : i32
    %c0_i32_0 = arith.constant 0 : i32
    %c0_i32_1 = arith.constant 0 : i32
    return %arg0, %c0_i32, %c0_i32_0 : i32, i32, i32
  }
  func.func @transform_1(%arg0: i32) -> (i32, i32, i32) {
    %c7_i32 = arith.constant 7 : i32
    %0 = arith.subi %c7_i32, %arg0 : i32
    %c0_i32 = arith.constant 0 : i32
    %c0_i32_0 = arith.constant 0 : i32
    %c0_i32_1 = arith.constant 0 : i32
    return %0, %c0_i32, %c0_i32_0 : i32, i32, i32
  }
  func.func @transform_2(%arg0: i32) -> (i32, i32) {
    %c0_i32 = arith.constant 0 : i32
    %c0_i32_0 = arith.constant 0 : i32
    %c0_i32_1 = arith.constant 0 : i32
    return %c0_i32, %c0_i32_0 : i32, i32
  }
  func.func @transform_3(%arg0: i32) -> (i32, i32) {
    %c0_i32 = arith.constant 0 : i32
    %c0_i32_0 = arith.constant 0 : i32
    %c0_i32_1 = arith.constant 0 : i32
    return %c0_i32, %c0_i32_0 : i32, i32
  }
  func.func @transform_4(%arg0: i32) -> (i32, i32) {
    %c0_i32 = arith.constant 0 : i32
    %c0_i32_0 = arith.constant 0 : i32
    %c0_i32_1 = arith.constant 0 : i32
    return %c0_i32, %c0_i32_0 : i32, i32
  }
  func.func @transform_5(%arg0: i32) -> (i32, i32) {
    %c0_i32 = arith.constant 0 : i32
    %c0_i32_0 = arith.constant 0 : i32
    %c0_i32_1 = arith.constant 0 : i32
    return %c0_i32, %c0_i32_0 : i32, i32
  }
  func.func @transform_6(%arg0: i32) -> (i32, i32, i32) {
    %c0_i32 = arith.constant 0 : i32
    %c0_i32_0 = arith.constant 0 : i32
    %c0_i32_1 = arith.constant 0 : i32
    return %arg0, %c0_i32, %c0_i32_0 : i32, i32, i32
  }
  func.func @transform_7(%arg0: i32) -> (i32, i32, i32) {
    %c7_i32 = arith.constant 7 : i32
    %0 = arith.subi %c7_i32, %arg0 : i32
    %c0_i32 = arith.constant 0 : i32
    %c0_i32_0 = arith.constant 0 : i32
    %c0_i32_1 = arith.constant 0 : i32
    return %0, %c0_i32, %c0_i32_0 : i32, i32, i32
  }
}

</mosaic_0001>

<llo_original>
// kernel: gru_encoder_forward.1
$region0: #{gru_encoder_forward.1}
  #allocation0 [shape = 'u32[]', space=smem, size = 0x4, offset = 0x4, fixed_abs, tag = 'smem constant byte address 0x4 - core index']
  #allocation1 [shape = 'u32[144,128]{1,0:T(1,128)}', space=vmem, size = 0x12000, scoped, tag = 'internal scratch']
  #allocation2 [shape = 'f32[2,32]{1,0:T(2,128)}', space=vmem, size = 0x400, scoped, tag = 'scratch operand']
  #allocation3 [shape = 'f32[2,32]{1,0:T(2,128)}', space=vmem, size = 0x400, scoped, tag = 'scratch operand']
  %s0 = inlined_call_operand.vmem [shape: f32[8,2,96], index: 0, kind: input, shape index: {}]
  %s1 = inlined_call_operand.vmem [shape: f32[8,2,96], index: 1, kind: input, shape index: {}]
  %s2 = inlined_call_operand.vmem [shape: f32[32,96], index: 2, kind: input, shape index: {}]
  %s3 = inlined_call_operand.vmem [shape: f32[32,96], index: 3, kind: input, shape index: {}]
  %s4 = inlined_call_operand.vmem [shape: f32[1,32], index: 4, kind: input, shape index: {}]
  %s5 = inlined_call_operand.vmem [shape: f32[1,32], index: 5, kind: input, shape index: {}]
  %s6 = inlined_call_operand.vmem [shape: f32[8,2,32], index: 6, kind: output, shape index: {0}]
  %s7 = inlined_call_operand.vmem [shape: f32[8,2,32], index: 7, kind: output, shape index: {1}]
  %8 = xla_tuple %s6, %s7
  %s9 = sld [smem:[#allocation0]]
  $region69: #{gru_encoder_forward.1} parent=0
    _
  %s11 = ssub.s32 1, %s9
  %s12 = scalar_select 0, %s11, %s9
  loop: start=0, step=1, limit=10
  $region2: #{gru_encoder_forward.1} parent=0 // loop_pre_header
    _
  $region3: #{gru_encoder_forward.1} parent=0 // loop_header
    %s14 = sphi 0, %s18
    %p15 = scmp.ge.s32.totalorder %s14, 10
    %s24 = sphi 0, %s26
    %s27 = sphi 0, %s24
    %s28 = sphi 0, %s27
    %s44 = sphi 0, %s28
    %s52 = sphi 0, %s54
    %s55 = sphi 0, %s52
    %s56 = sphi 0, %s55
    %s72 = sphi 0, %s56
    %s76 = sphi 0, %s76
    %s78 = sphi 0, %s76
    %s79 = sphi 0, %s78
    %s93 = sphi 0, %s79
    %s97 = sphi 0, %s97
    %s99 = sphi 0, %s97
    %s100 = sphi 0, %s99
    %s114 = sphi 0, %s100
    %s118 = sphi 0, %s118
    %s120 = sphi 0, %s118
    %s121 = sphi 0, %s120
    %s135 = sphi 0, %s121
    %s139 = sphi 0, %s139
    %s141 = sphi 0, %s139
    %s142 = sphi 0, %s141
    %s156 = sphi 0, %s142
    %s162 = sphi 0, %s164
    %s165 = sphi 0, %s162
    %s166 = sphi 0, %s165
    %s182 = sphi 0, %s166
    %s190 = sphi 0, %s192
    %s193 = sphi 0, %s190
    %s194 = sphi 0, %s193
    %s210 = sphi 0, %s194
  $region4: #{gru_encoder_forward.1} parent=0 // loop_header_branch
    %17 = sbr.rel (%p15) target = $region8
  $region5: #{gru_encoder_forward.1} parent=0 // loop_body
    %s19 = ssub.s32 %s14, 1
    %s20 = ssub.s32 %s14, 2
    %s21 = sadd.s32 %s14, 1
    %s22 = ssub.s32 %s14, %s21
    %p23 = scmp.eq.s32.totalorder %s22, 0
    %s25 = sadd.s32 %s24, 1
    %s26 = scalar_select %p23, %s24, %s25
    %p29 = pneg %p23
    %p30 = scmp.eq.s32.totalorder %s14, 7
    %p31 = por %p29, %p30
    %p32 = scmp.ne.s32.totalorder %s24, %s27
    %p33 = scmp.eq.s32.totalorder %s14, 0
    %p34 = por %p32, %p33
    %p35 = scmp.ne.s32.totalorder %s24, %s27
    %p36 = scmp.eq.s32.totalorder %s19, 7
    %p37 = por %p35, %p36
    %p38 = scmp.ne.s32.totalorder %s27, %s28
    %p39 = scmp.eq.s32.totalorder %s19, 0
    %p40 = por %p38, %p39
    %p41 = scmp.ne.s32.totalorder %s27, %s28
    %p42 = scmp.eq.s32.totalorder %s20, 7
    %p43 = por %p41, %p42
    %p45 = scmp.ne.s32.totalorder %s28, %s44
    %p46 = scmp.eq.s32.totalorder %s20, 0
    %p47 = por %p45, %p46
    %s48 = ssub.s32 7, %s14
    %s49 = ssub.s32 7, %s21
    %s50 = ssub.s32 %s48, %s49
    %p51 = scmp.eq.s32.totalorder %s50, 0
    %s53 = sadd.s32 %s52, 1
    %s54 = scalar_select %p51, %s52, %s53
    %p57 = pneg %p51
    %p58 = scmp.eq.s32.totalorder %s14, 7
    %p59 = por %p57, %p58
    %p60 = scmp.ne.s32.totalorder %s52, %s55
    %p61 = scmp.eq.s32.totalorder %s14, 0
    %p62 = por %p60, %p61
    %p63 = scmp.ne.s32.totalorder %s52, %s55
    %p64 = scmp.eq.s32.totalorder %s19, 7
    %p65 = por %p63, %p64
    %p66 = scmp.ne.s32.totalorder %s55, %s56
    %p67 = scmp.eq.s32.totalorder %s19, 0
    %p68 = por %p66, %p67
    %p69 = scmp.ne.s32.totalorder %s55, %s56
    %p70 = scmp.eq.s32.totalorder %s20, 7
    %p71 = por %p69, %p70
    %p73 = scmp.ne.s32.totalorder %s56, %s72
    %p74 = scmp.eq.s32.totalorder %s20, 0
    %p75 = por %p73, %p74
    %s77 = sadd.s32 %s76, 1
    %p80 = scmp.eq.s32.totalorder %s14, 7
    %p81 = scmp.ne.s32.totalorder %s76, %s78
    %p82 = scmp.eq.s32.totalorder %s14, 0
    %p83 = por %p81, %p82
    %p84 = scmp.ne.s32.totalorder %s76, %s78
    %p85 = scmp.eq.s32.totalorder %s19, 7
    %p86 = por %p84, %p85
    %p87 = scmp.ne.s32.totalorder %s78, %s79
    %p88 = scmp.eq.s32.totalorder %s19, 0
    %p89 = por %p87, %p88
    %p90 = scmp.ne.s32.totalorder %s78, %s79
    %p91 = scmp.eq.s32.totalorder %s20, 7
    %p92 = por %p90, %p91
    %p94 = scmp.ne.s32.totalorder %s79, %s93
    %p95 = scmp.eq.s32.totalorder %s20, 0
    %p96 = por %p94, %p95
    %s98 = sadd.s32 %s97, 1
    %p101 = scmp.eq.s32.totalorder %s14, 7
    %p102 = scmp.ne.s32.totalorder %s97, %s99
    %p103 = scmp.eq.s32.totalorder %s14, 0
    %p104 = por %p102, %p103
    %p105 = scmp.ne.s32.totalorder %s97, %s99
    %p106 = scmp.eq.s32.totalorder %s19, 7
    %p107 = por %p105, %p106
    %p108 = scmp.ne.s32.totalorder %s99, %s100
    %p109 = scmp.eq.s32.totalorder %s19, 0
    %p110 = por %p108, %p109
    %p111 = scmp.ne.s32.totalorder %s99, %s100
    %p112 = scmp.eq.s32.totalorder %s20, 7
    %p113 = por %p111, %p112
    %p115 = scmp.ne.s32.totalorder %s100, %s114
    %p116 = scmp.eq.s32.totalorder %s20, 0
    %p117 = por %p115, %p116
    %s119 = sadd.s32 %s118, 1
    %p122 = scmp.eq.s32.totalorder %s14, 7
    %p123 = scmp.ne.s32.totalorder %s118, %s120
    %p124 = scmp.eq.s32.totalorder %s14, 0
    %p125 = por %p123, %p124
    %p126 = scmp.ne.s32.totalorder %s118, %s120
    %p127 = scmp.eq.s32.totalorder %s19, 7
    %p128 = por %p126, %p127
    %p129 = scmp.ne.s32.totalorder %s120, %s121
    %p130 = scmp.eq.s32.totalorder %s19, 0
    %p131 = por %p129, %p130
    %p132 = scmp.ne.s32.totalorder %s120, %s121
    %p133 = scmp.eq.s32.totalorder %s20, 7
    %p134 = por %p132, %p133
    %p136 = scmp.ne.s32.totalorder %s121, %s135
    %p137 = scmp.eq.s32.totalorder %s20, 0
    %p138 = por %p136, %p137
    %s140 = sadd.s32 %s139, 1
    %p143 = scmp.eq.s32.totalorder %s14, 7
    %p144 = scmp.ne.s32.totalorder %s139, %s141
    %p145 = scmp.eq.s32.totalorder %s14, 0
    %p146 = por %p144, %p145
    %p147 = scmp.ne.s32.totalorder %s139, %s141
    %p148 = scmp.eq.s32.totalorder %s19, 7
    %p149 = por %p147, %p148
    %p150 = scmp.ne.s32.totalorder %s141, %s142
    %p151 = scmp.eq.s32.totalorder %s19, 0
    %p152 = por %p150, %p151
    %p153 = scmp.ne.s32.totalorder %s141, %s142
    %p154 = scmp.eq.s32.totalorder %s20, 7
    %p155 = por %p153, %p154
    %p157 = scmp.ne.s32.totalorder %s142, %s156
    %p158 = scmp.eq.s32.totalorder %s20, 0
    %p159 = por %p157, %p158
    %s160 = ssub.s32 %s14, %s21
    %p161 = scmp.eq.s32.totalorder %s160, 0
    %s163 = sadd.s32 %s162, 1
    %s164 = scalar_select %p161, %s162, %s163
    %p167 = pneg %p161
    %p168 = scmp.eq.s32.totalorder %s14, 7
    %p169 = por %p167, %p168
    %p170 = scmp.ne.s32.totalorder %s162, %s165
    %p171 = scmp.eq.s32.totalorder %s14, 0
    %p172 = por %p170, %p171
    %p173 = scmp.ne.s32.totalorder %s162, %s165
    %p174 = scmp.eq.s32.totalorder %s19, 7
    %p175 = por %p173, %p174
    %p176 = scmp.ne.s32.totalorder %s165, %s166
    %p177 = scmp.eq.s32.totalorder %s19, 0
    %p178 = por %p176, %p177
    %p179 = scmp.ne.s32.totalorder %s165, %s166
    %p180 = scmp.eq.s32.totalorder %s20, 7
    %p181 = por %p179, %p180
    %p183 = scmp.ne.s32.totalorder %s166, %s182
    %p184 = scmp.eq.s32.totalorder %s20, 0
    %p185 = por %p183, %p184
    %s186 = ssub.s32 7, %s14
    %s187 = ssub.s32 7, %s21
    %s188 = ssub.s32 %s186, %s187
    %p189 = scmp.eq.s32.totalorder %s188, 0
    %s191 = sadd.s32 %s190, 1
    %s192 = scalar_select %p189, %s190, %s191
    %p195 = pneg %p189
    %p196 = scmp.eq.s32.totalorder %s14, 7
    %p197 = por %p195, %p196
    %p198 = scmp.ne.s32.totalorder %s190, %s193
    %p199 = scmp.eq.s32.totalorder %s14, 0
    %p200 = por %p198, %p199
    %p201 = scmp.ne.s32.totalorder %s190, %s193
    %p202 = scmp.eq.s32.totalorder %s19, 7
    %p203 = por %p201, %p202
    %p204 = scmp.ne.s32.totalorder %s193, %s194
    %p205 = scmp.eq.s32.totalorder %s19, 0
    %p206 = por %p204, %p205
    %p207 = scmp.ne.s32.totalorder %s193, %s194
    %p208 = scmp.eq.s32.totalorder %s20, 7
    %p209 = por %p207, %p208
    %p211 = scmp.ne.s32.totalorder %s194, %s210
    %p212 = scmp.eq.s32.totalorder %s20, 0
    %p213 = por %p211, %p212
    %p214 = scmp.le.s32.totalorder 1, %s14
    %p215 = scmp.lt.s32.totalorder %s14, 9
    %p216 = pnand %p214, %p215
    %p217 = pneg %p216
    // Predicated region
    $region9: #{gru_encoder_forward.1} parent=5 // pred_check
      _
    $region10: #{gru_encoder_forward.1} parent=5 // pred_check_branch
      %219 = sbr.rel (%p216) target = $region12
    $region11: #{gru_encoder_forward.1} parent=5 // pred_region
      %s220 = ssub.s32 %s14, 1
      // Predicated region
      $region13: #{gru_encoder_forward.1} parent=11 // pred_check
        %p221 = pneg %p89
      $region14: #{gru_encoder_forward.1} parent=11 // pred_check_branch
        %223 = sbr.rel (%p221) target = $region16
      $region15: #{gru_encoder_forward.1} parent=11 // pred_region
        _
      $region16: #{gru_encoder_forward.1} parent=11 // pred_fallthru
        _
      // Predicated region
      $region17: #{gru_encoder_forward.1} parent=11 // pred_check
        %p224 = pneg %p110
      $region18: #{gru_encoder_forward.1} parent=11 // pred_check_branch
        %226 = sbr.rel (%p224) target = $region20
      $region19: #{gru_encoder_forward.1} parent=11 // pred_region
        _
      $region20: #{gru_encoder_forward.1} parent=11 // pred_fallthru
        _
      // Predicated region
      $region21: #{gru_encoder_forward.1} parent=11 // pred_check
        %p227 = pneg %p131
      $region22: #{gru_encoder_forward.1} parent=11 // pred_check_branch
        %229 = sbr.rel (%p227) target = $region24
      $region23: #{gru_encoder_forward.1} parent=11 // pred_region
        _
      $region24: #{gru_encoder_forward.1} parent=11 // pred_fallthru
        _
      // Predicated region
      $region25: #{gru_encoder_forward.1} parent=11 // pred_check
        %p230 = pneg %p152
      $region26: #{gru_encoder_forward.1} parent=11 // pred_check_branch
        %232 = sbr.rel (%p230) target = $region28
      $region27: #{gru_encoder_forward.1} parent=11 // pred_region
        _
      $region28: #{gru_encoder_forward.1} parent=11 // pred_fallthru
        _
    $region12: #{gru_encoder_forward.1} parent=5 // pred_fallthru
      _
    %p233 = scmp.lt.s32.totalorder %s14, 8
    // Predicated region
    $region29: #{gru_encoder_forward.1} parent=5 // pred_check
      %p234 = pneg %p233
    $region30: #{gru_encoder_forward.1} parent=5 // pred_check_branch
      %236 = sbr.rel (%p234) target = $region32
    $region31: #{gru_encoder_forward.1} parent=5 // pred_region
      // Predicated region
      $region33: #{gru_encoder_forward.1} parent=31 // pred_check
        %p237 = pneg %p34
      $region34: #{gru_encoder_forward.1} parent=31 // pred_check_branch
        %239 = sbr.rel (%p237) target = $region36
      $region35: #{gru_encoder_forward.1} parent=31 // pred_region
        %p240 = scmp.lt.s32.totalorder %s14, 7
        %s241 = scalar_select %p240, %s14, 7
        %s242 = smul.addr %s241, 2
        %s243 = scalar_lea.vmem %s0, %s242
      $region36: #{gru_encoder_forward.1} parent=31 // pred_fallthru
        _
      // Predicated region
      $region37: #{gru_encoder_forward.1} parent=31 // pred_check
        %p244 = pneg %p62
      $region38: #{gru_encoder_forward.1} parent=31 // pred_check_branch
        %246 = sbr.rel (%p244) target = $region40
      $region39: #{gru_encoder_forward.1} parent=31 // pred_region
        %s247 = ssub.s32 7, %s14
        %p248 = scmp.lt.s32.totalorder %s247, 7
        %s249 = scalar_select %p248, %s247, 7
        %s250 = smul.addr %s249, 2
        %s251 = scalar_lea.vmem %s1, %s250
        %s252 = ssub.s32 7, %s14
      $region40: #{gru_encoder_forward.1} parent=31 // pred_fallthru
        _
    $region32: #{gru_encoder_forward.1} parent=5 // pred_fallthru
      _
    %p253 = scmp.le.s32.totalorder 1, %s14
    %p254 = scmp.lt.s32.totalorder %s14, 9
    %p255 = pnand %p253, %p254
    %p256 = pneg %p255
    // Predicated region
    $region41: #{gru_encoder_forward.1} parent=5 // pred_check
      _
    $region42: #{gru_encoder_forward.1} parent=5 // pred_check_branch
      %258 = sbr.rel (%p255) target = $region44
    $region43: #{gru_encoder_forward.1} parent=5 // pred_region
      %s259 = ssub.s32 %s14, 1
      %p260 = scmp.lt.s32.totalorder %s19, 7
      %s261 = scalar_select %p260, %s19, 7
      %s262 = smul.addr %s261, 2
      %s263 = scalar_lea.vmem %s0, %s262
      %p264 = pneg %p40
      %p265 = pneg %p37
      %s266 = ssub.s32 7, %s19
      %p267 = scmp.lt.s32.totalorder %s266, 7
      %s268 = scalar_select %p267, %s266, 7
      %s269 = smul.addr %s268, 2
      %s270 = scalar_lea.vmem %s1, %s269
      %p271 = pneg %p68
      %p272 = pneg %p65
      %p273 = pneg %p89
      %p274 = pneg %p86
      %p275 = pneg %p110
      %p276 = pneg %p107
      %p277 = pneg %p131
      %p278 = pneg %p128
      %p279 = pneg %p152
      %p280 = pneg %p149
      %p281 = pneg %p178
      %p282 = pneg %p175
      %p283 = scmp.lt.s32.totalorder %s19, 7
      %s284 = scalar_select %p283, %s19, 7
      %s285 = smul.addr %s284, 2
      %s286 = scalar_lea.vmem %s6, %s285
      %p287 = pneg %p206
      %p288 = pneg %p203
      %s289 = ssub.s32 7, %s19
      %p290 = scmp.lt.s32.totalorder %s289, 7
      %s291 = scalar_select %p290, %s289, 7
      %s292 = smul.addr %s291, 2
      %s293 = scalar_lea.vmem %s7, %s292
      %p294 = scmp.lt.s32.totalorder %s19, 7
      %s295 = scalar_select %p294, %s19, 7
      %s296 = smul.addr %s295, 2
      %s297 = scalar_lea.vmem %s0, %s296
      %s298 = ssub.s32 7, %s19
      %p299 = scmp.lt.s32.totalorder %s298, 7
      %s300 = scalar_select %p299, %s298, 7
      %s301 = smul.addr %s300, 2
      %s302 = scalar_lea.vmem %s1, %s301
      %s303 = ssub.s32 7, %s19
      %p304 = scmp.lt.s32.totalorder %s19, 7
      %s305 = scalar_select %p304, %s19, 7
      %s306 = smul.addr %s305, 2
      %s307 = scalar_lea.vmem %s6, %s306
      %s308 = ssub.s32 7, %s19
      %p309 = scmp.lt.s32.totalorder %s308, 7
      %s310 = scalar_select %p309, %s308, 7
      %s311 = smul.addr %s310, 2
      %s312 = scalar_lea.vmem %s7, %s311
      %s313 = ssub.s32 7, %s19
      %p314 = scmp.eq.s32.totalorder %s19, 0
      // Predicated region
      $region45: #{gru_encoder_forward.1} parent=43 // pred_check
        %p315 = pneg %p314
      $region46: #{gru_encoder_forward.1} parent=43 // pred_check_branch
        %317 = sbr.rel (%p315) target = $region48
      $region47: #{gru_encoder_forward.1} parent=43 // pred_region
        %vm318 = vcmask 254976
        %319 = vst.msk [vmem:[#allocation2] sm:$0x3] %vm318, 0.0
        %320 = vst.msk [vmem:[#allocation3] sm:$0x3] %vm318, 0.0
      $region48: #{gru_encoder_forward.1} parent=43 // pred_fallthru
        _
      %v321 = vld [vmem:[#allocation2] sm:$0x3]
      %v322 = vld [vmem:[#allocation3] sm:$0x3]
      %v323 = vld [vmem:[%s2] sm:$0xff]
      %v324 = vld [vmem:[%s2 + $0x8] sm:$0xff]
      %v325 = vld [vmem:[%s2 + $0x10] sm:$0xff]
      %v326 = vld [vmem:[%s2 + $0x18] sm:$0xff]
      %vm327 = vcmask 261120
      %v329 = vsel %vm327, %v321, 0
      %331 = vmatprep.subr.mxu0 0.0
      %332 = vmatpush1.msra.mxu0 %v323
      %333 = vmatprep.subr.mxu0 0.0
      %334 = vmatpush1.msra.mxu0 %v324
      %335 = vmatprep.subr.mxu0 0.0
      %336 = vmatpush1.msra.mxu0 %v325
      %337 = vmatprep.subr.mxu0 0.0
      %338 = vmatpush1.msra.mxu0 %v326
      %339 = vmatprep.subr.mxu0 0.0
      %340 = vmatpush1.msra.mxu0 0.0
      %341 = vmatprep.subr.mxu0 0.0
      %342 = vmatpush1.msra.mxu0 0.0
      %343 = vmatprep.subr.mxu0 0.0
      %344 = vmatpush1.msra.mxu0 0.0
      %345 = vmatprep.subr.mxu0 0.0
      %346 = vmatpush1.msra.mxu0 0.0
      %347 = vmatprep.subr.mxu0 0.0
      %348 = vmatpush1.msra.mxu0 0.0
      %349 = vmatprep.subr.mxu0 0.0
      %350 = vmatpush1.msra.mxu0 0.0
      %351 = vmatprep.subr.mxu0 0.0
      %352 = vmatpush1.msra.mxu0 0.0
      %353 = vmatprep.subr.mxu0 0.0
      %354 = vmatpush1.msra.mxu0 0.0
      %355 = vmatprep.subr.mxu0 0.0
      %356 = vmatpush1.msra.mxu0 0.0
      %357 = vmatprep.subr.mxu0 0.0
      %358 = vmatpush1.msra.mxu0 0.0
      %359 = vmatprep.subr.mxu0 0.0
      %360 = vmatpush1.msra.mxu0 0.0
      %361 = vmatprep.subr.mxu0 0.0
      %362 = vmatpush1.msra.mxu0 0.0
      %363 = vmatprep.subr.mxu0 0.0
      %364 = vmatpush1.msra.mxu0 0.0
      %365 = vmatprep.subr.mxu0 0.0
      %366 = vmatpush1.msra.mxu0 0.0
      %367 = vmatprep.subr.mxu0 0.0
      %368 = vmatpush1.msra.mxu0 0.0
      %369 = vmatprep.subr.mxu0 0.0
      %370 = vmatpush1.msra.mxu0 0.0
      %371 = vmatprep.subr.mxu0 0.0
      %372 = vmatpush1.msra.mxu0 0.0
      %373 = vmatprep.subr.mxu0 0.0
      %374 = vmatpush1.msra.mxu0 0.0
      %375 = vmatprep.subr.mxu0 0.0
      %376 = vmatpush1.msra.mxu0 0.0
      %377 = vmatprep.subr.mxu0 0.0
      %378 = vmatpush1.msra.mxu0 0.0
      %379 = vmatprep.subr.mxu0 0.0
      %380 = vmatpush1.msra.mxu0 0.0
      %381 = vmatprep.subr.mxu0 0.0
      %382 = vmatpush1.msra.mxu0 0.0
      %383 = vmatprep.subr.mxu0 0.0
      %384 = vmatpush1.msra.mxu0 0.0
      %385 = vmatprep.subr.mxu0 0.0
      %386 = vmatpush1.msra.mxu0 0.0
      %387 = vmatprep.subr.mxu0 0.0
      %388 = vmatpush1.msra.mxu0 0.0
      %389 = vmatprep.subr.mxu0 0.0
      %390 = vmatpush1.msra.mxu0 0.0
      %391 = vmatprep.subr.mxu0 0.0
      %392 = vmatpush1.msra.mxu0 0.0
      %393 = vmatprep.subr.mxu0 0.0
      %394 = vmatpush1.msra.mxu0 0.0
      %395 = vmatprep.mubr.f32.mxu0 0.0
      %396 = vmatmul.mubr.f32.gmra.mrb[0].mxu0 %v329
      %v397 = vpop.f32.mrb[0].mxu0
      %v398 = vadd.f32 0.0, %v397
      %v399 = vpop.f32.mrb[0].mxu0
      %400 = vdwg.mxu0
      %v401 = vld [vmem:[%s3] sm:$0xff]
      %v402 = vld [vmem:[%s3 + $0x8] sm:$0xff]
      %v403 = vld [vmem:[%s3 + $0x10] sm:$0xff]
      %v404 = vld [vmem:[%s3 + $0x18] sm:$0xff]
      %v406 = vsel %vm327, %v322, 0
      %408 = vmatprep.subr.mxu0 0.0
      %409 = vmatpush1.msra.mxu0 %v401
      %410 = vmatprep.subr.mxu0 0.0
      %411 = vmatpush1.msra.mxu0 %v402
      %412 = vmatprep.subr.mxu0 0.0
      %413 = vmatpush1.msra.mxu0 %v403
      %414 = vmatprep.subr.mxu0 0.0
      %415 = vmatpush1.msra.mxu0 %v404
      %416 = vmatprep.subr.mxu0 0.0
      %417 = vmatpush1.msra.mxu0 0.0
      %418 = vmatprep.subr.mxu0 0.0
      %419 = vmatpush1.msra.mxu0 0.0
      %420 = vmatprep.subr.mxu0 0.0
      %421 = vmatpush1.msra.mxu0 0.0
      %422 = vmatprep.subr.mxu0 0.0
      %423 = vmatpush1.msra.mxu0 0.0
      %424 = vmatprep.subr.mxu0 0.0
      %425 = vmatpush1.msra.mxu0 0.0
      %426 = vmatprep.subr.mxu0 0.0
      %427 = vmatpush1.msra.mxu0 0.0
      %428 = vmatprep.subr.mxu0 0.0
      %429 = vmatpush1.msra.mxu0 0.0
      %430 = vmatprep.subr.mxu0 0.0
      %431 = vmatpush1.msra.mxu0 0.0
      %432 = vmatprep.subr.mxu0 0.0
      %433 = vmatpush1.msra.mxu0 0.0
      %434 = vmatprep.subr.mxu0 0.0
      %435 = vmatpush1.msra.mxu0 0.0
      %436 = vmatprep.subr.mxu0 0.0
      %437 = vmatpush1.msra.mxu0 0.0
      %438 = vmatprep.subr.mxu0 0.0
      %439 = vmatpush1.msra.mxu0 0.0
      %440 = vmatprep.subr.mxu0 0.0
      %441 = vmatpush1.msra.mxu0 0.0
      %442 = vmatprep.subr.mxu0 0.0
      %443 = vmatpush1.msra.mxu0 0.0
      %444 = vmatprep.subr.mxu0 0.0
      %445 = vmatpush1.msra.mxu0 0.0
      %446 = vmatprep.subr.mxu0 0.0
      %447 = vmatpush1.msra.mxu0 0.0
      %448 = vmatprep.subr.mxu0 0.0
      %449 = vmatpush1.msra.mxu0 0.0
      %450 = vmatprep.subr.mxu0 0.0
      %451 = vmatpush1.msra.mxu0 0.0
      %452 = vmatprep.subr.mxu0 0.0
      %453 = vmatpush1.msra.mxu0 0.0
      %454 = vmatprep.subr.mxu0 0.0
      %455 = vmatpush1.msra.mxu0 0.0
      %456 = vmatprep.subr.mxu0 0.0
      %457 = vmatpush1.msra.mxu0 0.0
      %458 = vmatprep.subr.mxu0 0.0
      %459 = vmatpush1.msra.mxu0 0.0
      %460 = vmatprep.subr.mxu0 0.0
      %461 = vmatpush1.msra.mxu0 0.0
      %462 = vmatprep.subr.mxu0 0.0
      %463 = vmatpush1.msra.mxu0 0.0
      %464 = vmatprep.subr.mxu0 0.0
      %465 = vmatpush1.msra.mxu0 0.0
      %466 = vmatprep.subr.mxu0 0.0
      %467 = vmatpush1.msra.mxu0 0.0
      %468 = vmatprep.subr.mxu0 0.0
      %469 = vmatpush1.msra.mxu0 0.0
      %470 = vmatprep.subr.mxu0 0.0
      %471 = vmatpush1.msra.mxu0 0.0
      %472 = vmatprep.mubr.f32.mxu0 0.0
      %473 = vmatmul.mubr.f32.gmra.mrb[0].mxu0 %v406
      %v474 = vpop.f32.mrb[0].mxu0
      %v475 = vadd.f32 0.0, %v474
      %v476 = vpop.f32.mrb[0].mxu0
      %477 = vdwg.mxu0
      %v478 = vld [vmem:[%s297] sm:$0x3]
      %v479 = vld [vmem:[%s302] sm:$0x3]
      %v480 = vadd.f32 %v478, %v398
      %v481 = vxor.u32 %v480, 2147483648
      %v482 = vmul.f32 %v481, 1.442695
      %v483 = vpow.pop %v482
      %v484 = vadd.f32 %v483, 1.0
      %v485 = vrcp.pop %v484
      %v486 = vmul.f32 1.0, %v485
      %v487 = vadd.f32 %v479, %v475
      %v488 = vxor.u32 %v487, 2147483648
      %v489 = vmul.f32 %v488, 1.442695
      %v490 = vpow.pop %v489
      %v491 = vadd.f32 %v490, 1.0
      %v492 = vrcp.pop %v491
      %v493 = vmul.f32 1.0, %v492
      %v494 = vld [vmem:[%s4] sm:$0x1]
      %v496 = vlaneseq
      %v497 = vshrl.u32 %v496, 7
      %v498 = vsub.s32 0, %v497
      %v499 = vrot.slane %v494, %v498
      %500 = vrot.lane.b32.xlu0 %v499, 64
      %v501 = vpop.permute.xlu0 %500
      %v503 = vadd.f32 %v398, %v501
      %505 = vrot.lane.b32.xlu0 %v503, 64
      %v506 = vpop.permute.xlu0 %505
      %v508 = vmul.f32 %v486, %v506
      %510 = vrot.lane.b32.xlu0 %v508, 64
      %v511 = vpop.permute.xlu0 %510
      %v513 = vadd.f32 %v478, %v511
      %v514 = vtanh.pop %v513
      %v515 = vld [vmem:[%s5] sm:$0x1]
      %v517 = vlaneseq
      %v518 = vshrl.u32 %v517, 7
      %v519 = vsub.s32 0, %v518
      %v520 = vrot.slane %v515, %v519
      %521 = vrot.lane.b32.xlu0 %v520, 64
      %v522 = vpop.permute.xlu0 %521
      %v524 = vadd.f32 %v475, %v522
      %526 = vrot.lane.b32.xlu0 %v524, 64
      %v527 = vpop.permute.xlu0 %526
      %v529 = vmul.f32 %v493, %v527
      %531 = vrot.lane.b32.xlu0 %v529, 64
      %v532 = vpop.permute.xlu0 %531
      %v534 = vadd.f32 %v479, %v532
      %v535 = vtanh.pop %v534
      %537 = vrot.lane.b32.xlu0 %v514, 64
      %v538 = vpop.permute.xlu0 %537
      %v540 = vsub.f32 %v321, %v538
      %542 = vrot.lane.b32.xlu0 %v540, 32
      %v543 = vpop.permute.xlu0 %542
      %v545 = vmul.f32 %v486, %v543
      %547 = vrot.lane.b32.xlu0 %v545, 32
      %v548 = vpop.permute.xlu0 %547
      %v550 = vadd.f32 %v514, %v548
      %552 = vrot.lane.b32.xlu0 %v535, 64
      %v553 = vpop.permute.xlu0 %552
      %v555 = vsub.f32 %v322, %v553
      %557 = vrot.lane.b32.xlu0 %v555, 32
      %v558 = vpop.permute.xlu0 %557
      %v560 = vmul.f32 %v493, %v558
      %562 = vrot.lane.b32.xlu0 %v560, 32
      %v563 = vpop.permute.xlu0 %562
      %v565 = vadd.f32 %v535, %v563
      %567 = vrot.lane.b32.xlu0 %v550, 64
      %v568 = vpop.permute.xlu0 %567
      %vm570 = vcmask 254976
      %571 = vst.msk [vmem:[#allocation2] sm:$0x3] %vm570, %v568
      %573 = vrot.lane.b32.xlu0 %v565, 64
      %v574 = vpop.permute.xlu0 %573
      %576 = vst.msk [vmem:[#allocation3] sm:$0x3] %vm570, %v574
      %577 = vst.msk [vmem:[%s307] sm:$0x3] %vm570, %v568
      %578 = vst.msk [vmem:[%s312] sm:$0x3] %vm570, %v574
      %p579 = scmp.lt.s32.totalorder %s19, 7
      %s580 = scalar_select %p579, %s19, 7
      %s581 = smul.addr %s580, 2
      %s582 = scalar_lea.vmem %s6, %s581
      %s583 = ssub.s32 7, %s19
      %p584 = scmp.lt.s32.totalorder %s583, 7
      %s585 = scalar_select %p584, %s583, 7
      %s586 = smul.addr %s585, 2
      %s587 = scalar_lea.vmem %s7, %s586
      // Predicated region
      $region49: #{gru_encoder_forward.1} parent=43 // pred_check
        %p588 = pneg %p175
      $region50: #{gru_encoder_forward.1} parent=43 // pred_check_branch
        %590 = sbr.rel (%p588) target = $region52
      $region51: #{gru_encoder_forward.1} parent=43 // pred_region
        _
      $region52: #{gru_encoder_forward.1} parent=43 // pred_fallthru
        _
      // Predicated region
      $region53: #{gru_encoder_forward.1} parent=43 // pred_check
        %p591 = pneg %p203
      $region54: #{gru_encoder_forward.1} parent=43 // pred_check_branch
        %593 = sbr.rel (%p591) target = $region56
      $region55: #{gru_encoder_forward.1} parent=43 // pred_region
        %s594 = ssub.s32 7, %s19
      $region56: #{gru_encoder_forward.1} parent=43 // pred_fallthru
        _
    $region44: #{gru_encoder_forward.1} parent=5 // pred_fallthru
      _
    %p595 = scmp.le.s32.totalorder 2, %s14
    // Predicated region
    $region57: #{gru_encoder_forward.1} parent=5 // pred_check
      %p596 = pneg %p595
    $region58: #{gru_encoder_forward.1} parent=5 // pred_check_branch
      %598 = sbr.rel (%p596) target = $region60
    $region59: #{gru_encoder_forward.1} parent=5 // pred_region
      %s599 = ssub.s32 %s14, 2
      // Predicated region
      $region61: #{gru_encoder_forward.1} parent=59 // pred_check
        %p600 = pneg %p181
      $region62: #{gru_encoder_forward.1} parent=59 // pred_check_branch
        %602 = sbr.rel (%p600) target = $region64
      $region63: #{gru_encoder_forward.1} parent=59 // pred_region
        %p603 = scmp.lt.s32.totalorder %s20, 7
        %s604 = scalar_select %p603, %s20, 7
        %s605 = smul.addr %s604, 2
        %s606 = scalar_lea.vmem %s6, %s605
      $region64: #{gru_encoder_forward.1} parent=59 // pred_fallthru
        _
      // Predicated region
      $region65: #{gru_encoder_forward.1} parent=59 // pred_check
        %p607 = pneg %p209
      $region66: #{gru_encoder_forward.1} parent=59 // pred_check_branch
        %609 = sbr.rel (%p607) target = $region68
      $region67: #{gru_encoder_forward.1} parent=59 // pred_region
        %s610 = ssub.s32 7, %s20
        %p611 = scmp.lt.s32.totalorder %s610, 7
        %s612 = scalar_select %p611, %s610, 7
        %s613 = smul.addr %s612, 2
        %s614 = scalar_lea.vmem %s7, %s613
      $region68: #{gru_encoder_forward.1} parent=59 // pred_fallthru
        _
    $region60: #{gru_encoder_forward.1} parent=5 // pred_fallthru
      _
  $region6: #{gru_encoder_forward.1} parent=0 // loop_footer
    %s18 = sadd.s32 1, %s14
  $region7: #{gru_encoder_forward.1} parent=0 // loop_footer_branch
    %13 = sbr.rel target = $region3
  $region8: #{gru_encoder_forward.1} parent=0 // loop_exit
    _

</llo_original>
